<compile_context>
chip_gen: v7x
topology: tpu7x:2x2x1
jax: 0.10.0
libtpu: 0.0.40
codegen_flags: <defaults>
</compile_context>

<pallas_src>
import jax
import jax.numpy as jnp
from jax.experimental import pallas as pl
from jax.experimental.pallas import tpu as pltpu

EPS = 1e-5

# Generation-safe VMEM caps: 48 MiB leaves headroom under v7x's 64 MiB physical
# VMEM while raising the 16 MiB (v5e) / 32 MiB (v6e, v7x) scoped defaults.
_VMEM_LIMIT_BYTES = 48 * 1024 * 1024
_VMEM_WORKSET_BUDGET = 40 * 1024 * 1024


def _bn_train_kernel(x_ref, gamma_ref, beta_ref, o_ref):
    """Fused BatchNorm2d training-mode forward for one channel slab.

    x_ref: (N, c_tile, H*W); gamma_ref / beta_ref: (c_tile, 1).
    One sweep of sufficient statistics (f32 accumulation), then a hoisted
    per-channel affine y = x * scale + shift applied in the input dtype.
    """
    x = x_ref[...]                                    # input dtype, loaded once
    n, ct, hw = x.shape
    inv_cnt = jnp.float32(1.0 / (n * hw))

    # One-pass sufficient stats: sum over batch (elementwise adds), then over
    # the lane axis (XLU reduce). Accumulate in f32.
    xf = x.astype(jnp.float32)
    s1 = jnp.sum(jnp.sum(xf, axis=0), axis=1, keepdims=True)        # (ct, 1)
    s2 = jnp.sum(jnp.sum(xf * xf, axis=0), axis=1, keepdims=True)   # (ct, 1)

    mean = s1 * inv_cnt
    var = s2 * inv_cnt - mean * mean    # biased variance (training-mode forward)
    inv_std = jax.lax.rsqrt(var + EPS)

    # Hoisted per-channel affine: apply path is 2 VALU ops per element.
    scale = gamma_ref[...].astype(jnp.float32) * inv_std             # (ct, 1)
    shift = beta_ref[...].astype(jnp.float32) - mean * scale         # (ct, 1)

    # Apply in the input dtype (bf16 stays bf16 on the VPU; f32 stays f32).
    y = x * scale[None, :, :].astype(x.dtype) + shift[None, :, :].astype(x.dtype)
    o_ref[...] = y.astype(o_ref.dtype)


def _working_set_bytes(c_tile, n, hw, itemsize):
    blk = n * c_tile * hw * itemsize
    # 2x double-buffered input + 2x double-buffered output + ~2 f32 blocks of
    # in-kernel reduction temporaries.
    return 4 * blk + 2 * n * c_tile * hw * 4


def _pick_c_tile(c, n, hw, itemsize):
    """Channel tile that divides C, is a multiple of 8 (sublane rule), fits the
    VMEM working-set budget, and prefers an *even* 2-4 step grid so the
    'parallel' channel axis shards 1:1 across v7x's two TensorCores while the
    BlockSpec double-buffer still overlaps DMA with compute on v5e/v6e."""
    cands = [t for t in range(8, c + 1, 8) if c % t == 0]
    if not cands:
        return c  # whole-C block: block dim == full array dim is always legal
    fitting = [t for t in cands
               if _working_set_bytes(t, n, hw, itemsize) <= _VMEM_WORKSET_BUDGET]
    if not fitting:
        # TODO(synk): for very large N even c_tile=8 can exceed VMEM; that case
        # needs an N-axis reduction grid (two-pass stats), not implemented here.
        return min(cands)

    def score(t):
        g = c // t
        return (g % 2 == 0 and 2 <= g <= 4,   # even grid with 2-4 steps (best)
                g % 2 == 0,                   # even grid (v7x core balance)
                2 <= g <= 4,                  # enough steps to pipeline, no more
                t)                            # then largest tile
    return max(fitting, key=score)


def batchnorm2d(x_nchw, gamma, beta, c_tile=None):
    """nn.BatchNorm2d forward (training-mode batch stats, affine), NCHW input."""
    n, c, h, w = x_nchw.shape
    hw = h * w
    # NCHW -> (N, C, H*W) is a free view (no data movement).
    x3d = x_nchw.reshape(n, c, hw)
    g2d = gamma.reshape(c, 1)
    b2d = beta.reshape(c, 1)

    if c_tile is None:
        c_tile = _pick_c_tile(c, n, hw, x_nchw.dtype.itemsize)
    assert c % c_tile == 0 and (c_tile % 8 == 0 or c_tile == c)

    out3d = pl.pallas_call(
        _bn_train_kernel,
        out_shape=jax.ShapeDtypeStruct((n, c, hw), x_nchw.dtype),
        grid=(c // c_tile,),
        in_specs=[
            pl.BlockSpec((n, c_tile, hw), lambda ci: (0, ci, 0)),
            pl.BlockSpec((c_tile, 1), lambda ci: (ci, 0)),
            pl.BlockSpec((c_tile, 1), lambda ci: (ci, 0)),
        ],
        out_specs=pl.BlockSpec((n, c_tile, hw), lambda ci: (0, ci, 0)),
        compiler_params=pltpu.CompilerParams(
            dimension_semantics=("parallel",),
            vmem_limit_bytes=_VMEM_LIMIT_BYTES,
        ),
    )(x3d, g2d, b2d)

    return out3d.reshape(n, c, h, w)


def _reference(x, gamma, beta):
    c = x.shape[1]
    mean = jnp.mean(x, axis=(0, 2, 3), keepdims=True)
    var = jnp.mean((x - mean) ** 2, axis=(0, 2, 3), keepdims=True)
    return (x - mean) * jax.lax.rsqrt(var + EPS) * gamma.reshape(1, c, 1, 1) \
        + beta.reshape(1, c, 1, 1)


if __name__ == "__main__":
    key = jax.random.PRNGKey(0)
    kx, kg, kb, kx2, kx3, kg3, kb3 = jax.random.split(key, 7)

    # Check 1: small shape consistent with the module (NCHW BatchNorm over C).
    N, C, H, W = 2, 4, 16, 16
    x = jax.random.normal(kx, (N, C, H, W), dtype=jnp.float32)
    gamma = 1.0 + 0.1 * jax.random.normal(kg, (C,), dtype=jnp.float32)
    beta = 0.1 * jax.random.normal(kb, (C,), dtype=jnp.float32)
    out = batchnorm2d(x, gamma, beta)
    jax.block_until_ready(out)
    assert jnp.allclose(out, _reference(x, gamma, beta), atol=5e-5, rtol=1e-5)

    # Check 2: explicit multi-step channel grid (c_tile=8 -> 2 grid steps).
    N2, C2, H2, W2 = 1, 16, 8, 16
    x2 = jax.random.normal(kx2, (N2, C2, H2, W2), dtype=jnp.float32)
    gamma2 = jnp.ones((C2,), dtype=jnp.float32)
    beta2 = jnp.zeros((C2,), dtype=jnp.float32)
    out2 = batchnorm2d(x2, gamma2, beta2, c_tile=8)
    jax.block_until_ready(out2)
    assert jnp.allclose(out2, _reference(x2, gamma2, beta2), atol=5e-5, rtol=1e-5)

    # Check 3: the module's real shape [1, 240, 28, 28], exercising the
    # auto-picked even grid (c_tile=120 -> 2 steps).
    N3, C3, H3, W3 = 1, 240, 28, 28
    x3 = jax.random.normal(kx3, (N3, C3, H3, W3), dtype=jnp.float32)
    gamma3 = 1.0 + 0.1 * jax.random.normal(kg3, (C3,), dtype=jnp.float32)
    beta3 = 0.1 * jax.random.normal(kb3, (C3,), dtype=jnp.float32)
    out3 = batchnorm2d(x3, gamma3, beta3)
    jax.block_until_ready(out3)
    assert jnp.allclose(out3, _reference(x3, gamma3, beta3), atol=5e-5, rtol=1e-5)

    # TODO(synk): running_mean/running_var momentum update is a training-mode
    # side effect (module state), not part of the returned tensor; omitted.
    print("KERNEL_OK")
</pallas_src>

<mosaic_0001>
module attributes {stable_mosaic.version = 11 : i64} {
  func.func @_bn_train_kernel(%arg0: i32, %arg1: memref<2x4x256xf32, #tpu.memory_space<vmem>>, %arg2: memref<4x1xf32, #tpu.memory_space<vmem>>, %arg3: memref<4x1xf32, #tpu.memory_space<vmem>>, %arg4: memref<2x4x256xf32, #tpu.memory_space<vmem>>) attributes {dimension_semantics = [#tpu.dimension_semantics<parallel>], iteration_bounds = array<i64: 1>, scalar_prefetch = 0 : i64, scratch_operands = 0 : i64, tpu.core_type = #tpu.core_type<tc>, window_params = [{transform_indices = @transform_0, window_bounds = array<i64: 2, 4, 256>}, {transform_indices = @transform_1, window_bounds = array<i64: 4, 1>}, {transform_indices = @transform_2, window_bounds = array<i64: 4, 1>}, {transform_indices = @transform_3, window_bounds = array<i64: 2, 4, 256>}]} {
    %c0 = arith.constant 0 : index
    %c0_0 = arith.constant 0 : index
    %c0_1 = arith.constant 0 : index
    %0 = vector.load %arg1[%c0, %c0_0, %c0_1] : memref<2x4x256xf32, #tpu.memory_space<vmem>>, vector<2x4x256xf32>
    %cst = arith.constant dense<0.000000e+00> : vector<4x256xf32>
    %1 = vector.multi_reduction <add>, %0, %cst [0] : vector<2x4x256xf32> to vector<4x256xf32>
    %cst_2 = arith.constant dense<0.000000e+00> : vector<4xf32>
    %2 = vector.multi_reduction <add>, %1, %cst_2 [1] : vector<4x256xf32> to vector<4xf32>
    %3 = vector.shape_cast %2 : vector<4xf32> to vector<4x1xf32>
    %4 = arith.mulf %0, %0 : vector<2x4x256xf32>
    %cst_3 = arith.constant dense<0.000000e+00> : vector<4x256xf32>
    %5 = vector.multi_reduction <add>, %4, %cst_3 [0] : vector<2x4x256xf32> to vector<4x256xf32>
    %cst_4 = arith.constant dense<0.000000e+00> : vector<4xf32>
    %6 = vector.multi_reduction <add>, %5, %cst_4 [1] : vector<4x256xf32> to vector<4xf32>
    %7 = vector.shape_cast %6 : vector<4xf32> to vector<4x1xf32>
    %cst_5 = arith.constant 0.001953125 : f32
    %8 = vector.broadcast %cst_5 : f32 to vector<4x1xf32>
    %9 = arith.mulf %3, %8 : vector<4x1xf32>
    %cst_6 = arith.constant 0.001953125 : f32
    %10 = vector.broadcast %cst_6 : f32 to vector<4x1xf32>
    %11 = arith.mulf %7, %10 : vector<4x1xf32>
    %12 = arith.mulf %9, %9 : vector<4x1xf32>
    %13 = arith.subf %11, %12 : vector<4x1xf32>
    %cst_7 = arith.constant 9.99999974E-6 : f32
    %14 = vector.broadcast %cst_7 : f32 to vector<4x1xf32>
    %15 = arith.addf %13, %14 : vector<4x1xf32>
    %16 = math.rsqrt %15 : vector<4x1xf32>
    %c0_8 = arith.constant 0 : index
    %c0_9 = arith.constant 0 : index
    %17 = vector.load %arg2[%c0_8, %c0_9] : memref<4x1xf32, #tpu.memory_space<vmem>>, vector<4x1xf32>
    %18 = arith.mulf %17, %16 : vector<4x1xf32>
    %c0_10 = arith.constant 0 : index
    %c0_11 = arith.constant 0 : index
    %19 = vector.load %arg3[%c0_10, %c0_11] : memref<4x1xf32, #tpu.memory_space<vmem>>, vector<4x1xf32>
    %20 = arith.mulf %9, %18 : vector<4x1xf32>
    %21 = arith.subf %19, %20 : vector<4x1xf32>
    %22 = vector.shape_cast %18 : vector<4x1xf32> to vector<1x4x1xf32>
    %23 = vector.broadcast %22 : vector<1x4x1xf32> to vector<2x4x256xf32>
    %24 = arith.mulf %0, %23 : vector<2x4x256xf32>
    %25 = vector.shape_cast %21 : vector<4x1xf32> to vector<1x4x1xf32>
    %26 = vector.broadcast %25 : vector<1x4x1xf32> to vector<2x4x256xf32>
    %27 = arith.addf %24, %26 : vector<2x4x256xf32>
    %c0_12 = arith.constant 0 : index
    %c0_13 = arith.constant 0 : index
    %c0_14 = arith.constant 0 : index
    %28 = vector.load %arg4[%c0_12, %c0_13, %c0_14] : memref<2x4x256xf32, #tpu.memory_space<vmem>>, vector<2x4x256xf32>
    tpu.vector_store %arg4[%c0_12, %c0_13, %c0_14], %27 {strides = array<i32>} : memref<2x4x256xf32, #tpu.memory_space<vmem>>, vector<2x4x256xf32>,
    return
  }
  func.func @transform_0(%arg0: i32) -> (i32, i32, i32) {
    %c0_i32 = arith.constant 0 : i32
    %c0_i32_0 = arith.constant 0 : i32
    %c0_i32_1 = arith.constant 0 : i32
    return %c0_i32, %arg0, %c0_i32_0 : i32, i32, i32
  }
  func.func @transform_1(%arg0: i32) -> (i32, i32) {
    %c0_i32 = arith.constant 0 : i32
    %c0_i32_0 = arith.constant 0 : i32
    return %arg0, %c0_i32 : i32, i32
  }
  func.func @transform_2(%arg0: i32) -> (i32, i32) {
    %c0_i32 = arith.constant 0 : i32
    %c0_i32_0 = arith.constant 0 : i32
    return %arg0, %c0_i32 : i32, i32
  }
  func.func @transform_3(%arg0: i32) -> (i32, i32, i32) {
    %c0_i32 = arith.constant 0 : i32
    %c0_i32_0 = arith.constant 0 : i32
    %c0_i32_1 = arith.constant 0 : i32
    return %c0_i32, %arg0, %c0_i32_0 : i32, i32, i32
  }
}

</mosaic_0001>

<llo_original>
// kernel: tpu_custom_call.1
$region0: #{tpu_custom_call.1}
  #allocation0 [shape = 'u32[]', space=smem, size = 0x4, offset = 0x4, fixed_abs, tag = 'smem constant byte address 0x4 - core index']
  #allocation1 [shape = 'u32[144,128]{1,0:T(1,128)}', space=vmem, size = 0x12000, scoped, tag = 'internal scratch']
  %s0 = inlined_call_operand.hbm [shape: f32[2,4,256], index: 0, kind: input, shape index: {}]
  %s1 = inlined_call_operand.vmem [shape: f32[4,1], index: 1, kind: input, shape index: {}]
  %s2 = inlined_call_operand.vmem [shape: f32[4,1], index: 2, kind: input, shape index: {}]
  %s3 = inlined_call_operand.hbm [shape: f32[2,4,256], index: 3, kind: output, shape index: {}]
  %s4 = sld [smem:[#allocation0]]
  $region26: #{tpu_custom_call.1} parent=0
    _
  %s6 = ssub.s32 1, %s4
  %s7 = scalar_select 0, %s6, %s4
  $region1: #{tpu_custom_call.1} parent=0
    #allocation2 [shape = 'u8[8192]{0}', space=vmem, size = 0x2000, scoped, tag = 'input window, operand 0, single buffered']
    #allocation3 [shape = 's32[1]{0}', space=sflag, size = 0x4, scoped, tag = 'scoped memory for tpu_custom_call.1']
    #allocation4 [shape = 's32[1]{0}', space=sflag, size = 0x4, scoped, tag = 'scoped memory for tpu_custom_call.1']
    #allocation5 [shape = 'u8[8192]{0}', space=vmem, size = 0x2000, scoped, tag = 'output window, operand 0, single buffered']
    %8 = vsyncpa [#allocation3], 0
    %9 = vsyncpa [#allocation4], 0
    // Predicated region
    $region2: #{tpu_custom_call.1} parent=1 // pred_check
      _
    $region3: #{tpu_custom_call.1} parent=1 // pred_check_branch
      %11 = sbr.rel (0) target = $region5
    $region4: #{tpu_custom_call.1} parent=1 // pred_region
      %s13 = ssub.s32 256, 256
      %14 = vsyncadd [#allocation3], %s13
      %s15 = sshll.u32 [#allocation2], 4
      %s16 = int_to_ptr.vmem [resolvable:$true] %s15
      %21 = dma.hbm_to_vmem [thread:$0]  %s0, 256, %s16, [#allocation3], 128, 128, 8
    $region5: #{tpu_custom_call.1} parent=1 // pred_fallthru
      _
    // Predicated region
    $region6: #{tpu_custom_call.1} parent=1 // pred_check
      _
    $region7: #{tpu_custom_call.1} parent=1 // pred_check_branch
      %23 = sbr.rel (0) target = $region9
    $region8: #{tpu_custom_call.1} parent=1 // pred_region
      _
    $region9: #{tpu_custom_call.1} parent=1 // pred_fallthru
      _
    // Predicated region
    $region10: #{tpu_custom_call.1} parent=1 // pred_check
      _
    $region11: #{tpu_custom_call.1} parent=1 // pred_check_branch
      %25 = sbr.rel (0) target = $region13
    $region12: #{tpu_custom_call.1} parent=1 // pred_region
      _
    $region13: #{tpu_custom_call.1} parent=1 // pred_fallthru
      _
    // Predicated region
    $region14: #{tpu_custom_call.1} parent=1 // pred_check
      _
    $region15: #{tpu_custom_call.1} parent=1 // pred_check_branch
      %27 = sbr.rel (0) target = $region17
    $region16: #{tpu_custom_call.1} parent=1 // pred_region
      %28 = dma.done [#allocation3], 256
    $region17: #{tpu_custom_call.1} parent=1 // pred_fallthru
      _
    %v29 = vld [vmem:[#allocation2] sm:$0xff]
    %v30 = vld [vmem:[#allocation2 + $0x8] sm:$0xff]
    %v33 = vcombine.high %v29, %v29
    %v34 = vcombine.high %v30, %v30
    %vm37 = vcmask 1043456
    %v38 = vsel %vm37, %v29, 0.0
    %v39 = vsel %vm37, %v30, 0.0
    %v40 = vadd.f32 %v38, %v39
    %v41 = vsel %vm37, %v33, 0.0
    %v42 = vsel %vm37, %v34, 0.0
    %v43 = vadd.f32 %v41, %v42
    %v44 = vsel %vm37, %v40, 0.0
    %v45 = vsel %vm37, %v43, 0.0
    %v46 = vadd.f32 %v44, %v45
    %47 = vadd.xlane.f32.xlu0 %v46
    %v48 = vpop.xlane.xlu0 %47
    %v49 = vmul.f32 %v29, %v29
    %v50 = vmul.f32 %v30, %v30
    %v53 = vcombine.high %v49, %v49
    %v54 = vcombine.high %v50, %v50
    %v57 = vsel %vm37, %v49, 0.0
    %v58 = vsel %vm37, %v50, 0.0
    %v59 = vadd.f32 %v57, %v58
    %v60 = vsel %vm37, %v53, 0.0
    %v61 = vsel %vm37, %v54, 0.0
    %v62 = vadd.f32 %v60, %v61
    %v63 = vsel %vm37, %v59, 0.0
    %v64 = vsel %vm37, %v62, 0.0
    %v65 = vadd.f32 %v63, %v64
    %66 = vadd.xlane.f32.xlu0 %v65
    %v67 = vpop.xlane.xlu0 %66
    %v68 = vmul.f32 %v48, 0.001953125
    %v69 = vmul.f32 %v67, 0.001953125
    %v70 = vmul.f32 %v68, %v68
    %v71 = vsub.f32 %v69, %v70
    %v72 = vadd.f32 %v71, 1e-05
    %v73 = vrsqrt.pop %v72
    %v74 = vld [vmem:[%s1] sm:$0xf]
    %v75 = vmul.f32 %v74, %v73
    %v76 = vld [vmem:[%s2] sm:$0xf]
    %v77 = vmul.f32 %v68, %v75
    %v78 = vsub.f32 %v76, %v77
    %80 = vset.pattern.permute.xlu0 0
    %81 = vperm.xlu0 %80, %v75
    %v82 = vpop.permute.xlu0 %81
    %v84 = vunpack.c.l.s4 839922192
    %v85 = vunpack.c.0.s8 %v84
    %v86 = vlaneseq
    %v87 = vshrl.u32 %v86, 7
    %v88 = vsub.s32 %v85, %v87
    %v89 = vrot.slane %v82, %v88
    %v91 = vmul.f32 %v29, %v89
    %v92 = vmul.f32 %v30, %v89
    %94 = vset.pattern.permute.xlu0 0
    %95 = vperm.xlu0 %94, %v78
    %v96 = vpop.permute.xlu0 %95
    %v98 = vunpack.c.l.s4 839922192
    %v99 = vunpack.c.0.s8 %v98
    %v100 = vlaneseq
    %v101 = vshrl.u32 %v100, 7
    %v102 = vsub.s32 %v99, %v101
    %v103 = vrot.slane %v96, %v102
    %v105 = vadd.f32 %v91, %v103
    %v106 = vadd.f32 %v92, %v103
    %107 = vst [vmem:[#allocation5] sm:$0xff] %v105
    %108 = vst [vmem:[#allocation5 + $0x8] sm:$0xff] %v106
    // Predicated region
    $region18: #{tpu_custom_call.1} parent=1 // pred_check
      _
    $region19: #{tpu_custom_call.1} parent=1 // pred_check_branch
      %110 = sbr.rel (0) target = $region21
    $region20: #{tpu_custom_call.1} parent=1 // pred_region
      %s112 = ssub.s32 256, 256
      %113 = vsyncadd [#allocation4], %s112
      %s114 = sshll.u32 [#allocation5], 4
      %s115 = int_to_ptr.vmem [resolvable:$true] %s114
      %120 = dma.vmem_to_hbm [thread:$0]  %s115, 256, %s3, [#allocation4], 128, 128, 8
    $region21: #{tpu_custom_call.1} parent=1 // pred_fallthru
      _
    // Predicated region
    $region22: #{tpu_custom_call.1} parent=1 // pred_check
      _
    $region23: #{tpu_custom_call.1} parent=1 // pred_check_branch
      %122 = sbr.rel (0) target = $region25
    $region24: #{tpu_custom_call.1} parent=1 // pred_region
      %123 = dma.done [#allocation4], 256
    $region25: #{tpu_custom_call.1} parent=1 // pred_fallthru
      _
    %124 = vsyncpa [#allocation3], 1
    %125 = vsyncpa [#allocation4], 1

</llo_original>
